<compile_context>
chip_gen: v5e
topology: v5e:2x2
jax: 0.10.0
libtpu: 0.0.40
codegen_flags: <defaults>
</compile_context>

<pallas_src>
import jax
import jax.numpy as jnp
from jax import lax
from jax.experimental import pallas as pl
from jax.experimental.pallas import tpu as pltpu


def _round_up(x, m):
    return (x + m - 1) // m * m


def _pick_n_tile(n, max_rows=512):
    """Largest multiple-of-8 divisor of n up to max_rows.

    In the fused kernel the whole per-batch projection table is VMEM-resident, so
    the tile only sets the output-writeback/pipelining granularity; bigger is
    better until the double-buffered output block starts to matter for VMEM."""
    if n <= max_rows:
        return n
    best = None
    for t in range(8, max_rows + 1, 8):
        if n % t == 0:
            best = t
    if best is None:
        # No multiple-of-8 divisor under the cap (e.g. prime-ish N): fall back to
        # the full row dimension (block == full dim is always a legal BlockSpec).
        return n
    return best


def _vmem_capacity_bytes():
    try:
        return int(pltpu.get_tpu_info().vmem_capacity_bytes)
    except Exception:
        return 64 * 1024 * 1024  # conservative: v7x per-TensorCore VMEM


def _make_kernel(n_vertices, k_neighbors, n_tile):
    N, K = n_vertices, k_neighbors

    def kernel(ii_ref, jj_ref, x_ref, wd_ref, wj_ref, bias_ref, o_ref, u_ref, v_ref):
        # ii_ref/jj_ref : SMEM (B*N*K,) int32 flattened neighbor indices
        # x_ref         : (N, C)        per-batch vertex features
        # wd_ref/wj_ref : (C, Coutp)    (W1 - W2)^T and W2^T, zero-padded to Coutp
        # bias_ref      : (1, Coutp)
        # o_ref         : (n_tile, Coutp) output tile
        # u_ref/v_ref   : (N, Coutp)    VMEM-resident per-batch projection tables
        b = pl.program_id(0)
        nb = pl.program_id(1)

        # ---- phase 1 (once per batch): project every vertex once on the MXU -----
        #   u = x (W1 - W2)^T   (coefficient of x_i),   v = x W2^T  (coefficient of x_j)
        @pl.when(nb == 0)
        def _():
            xb = x_ref[...]
            u_ref[...] = jnp.dot(xb, wd_ref[...], preferred_element_type=jnp.float32)
            v_ref[...] = jnp.dot(xb, wj_ref[...], preferred_element_type=jnp.float32)

        # ---- phase 2: in-VMEM neighbor gather + running max over K --------------
        base0 = (b * N + nb * n_tile) * K

        def row_body(r, carry):
            base = base0 + r * K
            m = (u_ref[pl.ds(ii_ref[base], 1), :] +
                 v_ref[pl.ds(jj_ref[base], 1), :])
            for k in range(1, K):  # K is small & static -> unrolled VPU maxes
                m = jnp.maximum(
                    m,
                    u_ref[pl.ds(ii_ref[base + k], 1), :] +
                    v_ref[pl.ds(jj_ref[base + k], 1), :])
            o_ref[pl.ds(r, 1), :] = m
            return carry

        lax.fori_loop(0, n_tile, row_body, 0)

        # ---- epilogue: bias + ReLU (hoisted out of the K max), full-tile VPU op --
        o_ref[...] = jnp.maximum(o_ref[...] + bias_ref[...], 0.0)

    return kernel


def edge_conv2d(x, edge_index, weight, bias):
    """x: (B, C, N, 1) f32; edge_index: (2, B, N, K) int; weight: (Cout, 2C)
    (PyTorch Conv2d weight[:, :, 0, 0]); bias: (Cout,).  Returns (B, Cout, N, 1)."""
    B, C, N, _ = x.shape
    K = edge_index.shape[-1]
    Cout = weight.shape[0]
    Coutp = _round_up(Cout, 128)               # lane-dense output width
    n_tile = _pick_n_tile(N)
    assert N % n_tile == 0
    n_blocks = N // n_tile

    # ----- parameter prep (linearity rewrite, zero lane padding) ------------------
    w = jnp.asarray(weight, jnp.float32)                    # (Cout, 2C)
    w1, w2 = w[:, :C], w[:, C:]
    wd = jnp.zeros((C, Coutp), jnp.float32).at[:, :Cout].set(jnp.transpose(w1 - w2))
    wj = jnp.zeros((C, Coutp), jnp.float32).at[:, :Cout].set(jnp.transpose(w2))
    bp = jnp.zeros((1, Coutp), jnp.float32).at[0, :Cout].set(
        jnp.asarray(bias, jnp.float32))

    xt = jnp.transpose(x[..., 0], (0, 2, 1)).astype(jnp.float32)     # (B, N, C)

    # Flattened neighbor indices for SMEM scalar prefetch (1-D avoids the (8,128)
    # SMEM padding blow-up of multi-dim scalar arrays).  Flat order is (b, n, k).
    idx_i = edge_index[1].astype(jnp.int32).reshape(-1)   # center   -> u table
    idx_j = edge_index[0].astype(jnp.int32).reshape(-1)   # neighbor -> v table

    # ----- VMEM budget / cost hints ------------------------------------------------
    vmem_need = (2 * N * C * 4                 # x slab (double-buffered)
                 + 2 * 2 * C * Coutp * 4       # wd, wj
                 + 2 * Coutp * 4               # bias
                 + 2 * n_tile * Coutp * 4      # output block (double-buffered)
                 + 2 * N * Coutp * 4)          # u/v scratch tables
    vmem_limit = int(min(max(int(1.5 * vmem_need) + (2 << 20), 16 << 20),
                         int(0.85 * _vmem_capacity_bytes())))

    cost = pl.CostEstimate(
        flops=2 * B * N * C * 2 * Coutp + 2 * B * N * K * Coutp,
        transcendentals=0,
        bytes_accessed=B * N * C * 4 + B * N * Coutp * 4 + 2 * B * N * K * 4,
    )

    kernel = _make_kernel(N, K, n_tile)

    out_p = pl.pallas_call(
        kernel,
        out_shape=jax.ShapeDtypeStruct((B, N, Coutp), jnp.float32),
        grid_spec=pltpu.PrefetchScalarGridSpec(
            num_scalar_prefetch=2,
            grid=(B, n_blocks),
            in_specs=[
                pl.BlockSpec((pl.Squeezed(), N, C), lambda b, n, ii, jj: (b, 0, 0)),
                pl.BlockSpec((C, Coutp), lambda b, n, ii, jj: (0, 0)),
                pl.BlockSpec((C, Coutp), lambda b, n, ii, jj: (0, 0)),
                pl.BlockSpec((1, Coutp), lambda b, n, ii, jj: (0, 0)),
            ],
            out_specs=pl.BlockSpec((pl.Squeezed(), n_tile, Coutp),
                                   lambda b, n, ii, jj: (b, n, 0)),
            scratch_shapes=[
                pltpu.VMEM((N, Coutp), jnp.float32),   # u table (per batch)
                pltpu.VMEM((N, Coutp), jnp.float32),   # v table (per batch)
            ],
        ),
        compiler_params=pltpu.CompilerParams(
            dimension_semantics=("parallel", "arbitrary"),
            vmem_limit_bytes=vmem_limit,
        ),
        cost_estimate=cost,
    )(idx_i, idx_j, xt, wd, wj, bp)

    out = out_p[..., :Cout]                             # drop the lane padding
    return jnp.transpose(out, (0, 2, 1))[..., None]     # (B, Cout, N, 1) NCHW


# ---------------------------------------------------------------------------
# Pure-JAX reference mirroring the PyTorch module (for validation)
# ---------------------------------------------------------------------------
def batched_index_select(x, idx):
    # x: (B, C, N), idx: (B, N, K) -> out[b, c, n, k] = x[b, c, idx[b, n, k]]
    return jnp.take_along_axis(x[:, :, :, None], idx[:, None, :, :], axis=2)


def edge_conv2d_ref(x, edge_index, weight, bias):
    xs = x[..., 0]
    x_i = batched_index_select(xs, edge_index[1])
    x_j = batched_index_select(xs, edge_index[0])
    feat = jnp.concatenate([x_i, x_j - x_i], axis=1)             # (B, 2C, N, K)
    y = jnp.einsum('bcnk,oc->bonk', feat, weight) + bias[None, :, None, None]
    y = jnp.maximum(y, 0.0)
    return jnp.max(y, axis=-1, keepdims=True)                    # (B, Cout, N, 1)


if __name__ == "__main__":
    B, C, N, K, Cout = 2, 4, 16, 8, 32

    key = jax.random.PRNGKey(0)
    kx, kidx, kw, kb = jax.random.split(key, 4)

    x = jax.random.normal(kx, (B, C, N, 1), dtype=jnp.float32)
    edge_index = jax.random.randint(kidx, (2, B, N, K), 0, N, dtype=jnp.int32)

    # Parameters with the shapes of nn.Conv2d(2C, Cout, 1, bias=True).
    weight = jax.random.normal(kw, (Cout, 2 * C), dtype=jnp.float32) * 0.1
    bias = jax.random.normal(kb, (Cout,), dtype=jnp.float32) * 0.1

    out = jax.block_until_ready(edge_conv2d(x, edge_index, weight, bias))
    ref = edge_conv2d_ref(x, edge_index, weight, bias)

    assert out.shape == (B, Cout, N, 1)
    assert jnp.allclose(out, ref, rtol=1e-5, atol=1e-5)
    print("KERNEL_OK")
</pallas_src>

<mosaic_0001>
module attributes {stable_mosaic.version = 11 : i64} {
  func.func @kernel(%arg0: i32, %arg1: i32, %arg2: memref<256xi32, #tpu.memory_space<smem>>, %arg3: memref<256xi32, #tpu.memory_space<smem>>, %arg4: memref<1x16x4xf32, #tpu.memory_space<vmem>>, %arg5: memref<4x128xf32, #tpu.memory_space<vmem>>, %arg6: memref<4x128xf32, #tpu.memory_space<vmem>>, %arg7: memref<1x128xf32, #tpu.memory_space<vmem>>, %arg8: memref<1x16x128xf32, #tpu.memory_space<vmem>>, %arg9: memref<16x128xf32, #tpu.memory_space<vmem>>, %arg10: memref<16x128xf32, #tpu.memory_space<vmem>>) attributes {dimension_semantics = [#tpu.dimension_semantics<parallel>, #tpu.dimension_semantics<arbitrary>], iteration_bounds = array<i64: 2, 1>, scalar_prefetch = 2 : i64, scratch_operands = 2 : i64, tpu.core_type = #tpu.core_type<tc>, window_params = [{transform_indices = @transform_0, window_bounds = array<i64: 1, 16, 4>}, {pipeline_mode = #tpu.pipeline_mode<synchronous>, transform_indices = @transform_1, window_bounds = array<i64: 4, 128>}, {pipeline_mode = #tpu.pipeline_mode<synchronous>, transform_indices = @transform_2, window_bounds = array<i64: 4, 128>}, {pipeline_mode = #tpu.pipeline_mode<synchronous>, transform_indices = @transform_3, window_bounds = array<i64: 1, 128>}, {transform_indices = @transform_4, window_bounds = array<i64: 1, 16, 128>}]} {
    %c0_i32 = arith.constant 0 : i32
    %0 = arith.cmpi eq, %arg1, %c0_i32 : i32
    %1 = arith.extui %0 : i1 to i32
    %c0_i32_0 = arith.constant 0 : i32
    %2 = arith.cmpi ne, %1, %c0_i32_0 : i32
    scf.if %2 {
      %c0_12 = arith.constant 0 : index
      %c0_13 = arith.constant 0 : index
      %c0_14 = arith.constant 0 : index
      %18 = vector.load %arg4[%c0_12, %c0_13, %c0_14] : memref<1x16x4xf32, #tpu.memory_space<vmem>>, vector<1x16x4xf32>
      %19 = vector.shape_cast %18 : vector<1x16x4xf32> to vector<16x4xf32>
      %c0_15 = arith.constant 0 : index
      %c0_16 = arith.constant 0 : index
      %20 = vector.load %arg5[%c0_15, %c0_16] : memref<4x128xf32, #tpu.memory_space<vmem>>, vector<4x128xf32>
      %cst_17 = arith.constant dense<0.000000e+00> : vector<16x128xf32>
      %21 = tpu.matmul %19, %20, %cst_17 {dimension_numbers = #tpu.dot_dimension_numbers<[1], [0], [0], [1], [0, 0, 1, 1], [], []>} : vector<16x4xf32>, vector<4x128xf32>, vector<16x128xf32> -> vector<16x128xf32>
      %c0_18 = arith.constant 0 : index
      %c0_19 = arith.constant 0 : index
      %22 = vector.load %arg9[%c0_18, %c0_19] : memref<16x128xf32, #tpu.memory_space<vmem>>, vector<16x128xf32>
      tpu.vector_store %arg9[%c0_18, %c0_19], %21 {strides = array<i32>} : memref<16x128xf32, #tpu.memory_space<vmem>>, vector<16x128xf32>,
      %c0_20 = arith.constant 0 : index
      %c0_21 = arith.constant 0 : index
      %23 = vector.load %arg6[%c0_20, %c0_21] : memref<4x128xf32, #tpu.memory_space<vmem>>, vector<4x128xf32>
      %cst_22 = arith.constant dense<0.000000e+00> : vector<16x128xf32>
      %24 = tpu.matmul %19, %23, %cst_22 {dimension_numbers = #tpu.dot_dimension_numbers<[1], [0], [0], [1], [0, 0, 1, 1], [], []>} : vector<16x4xf32>, vector<4x128xf32>, vector<16x128xf32> -> vector<16x128xf32>
      %c0_23 = arith.constant 0 : index
      %c0_24 = arith.constant 0 : index
      %25 = vector.load %arg10[%c0_23, %c0_24] : memref<16x128xf32, #tpu.memory_space<vmem>>, vector<16x128xf32>
      tpu.vector_store %arg10[%c0_23, %c0_24], %24 {strides = array<i32>} : memref<16x128xf32, #tpu.memory_space<vmem>>, vector<16x128xf32>,
    } else {
    }
    %c16_i32 = arith.constant 16 : i32
    %3 = arith.muli %arg0, %c16_i32 : i32
    %c16_i32_1 = arith.constant 16 : i32
    %4 = arith.muli %arg1, %c16_i32_1 : i32
    %5 = arith.addi %3, %4 : i32
    %c8_i32 = arith.constant 8 : i32
    %6 = arith.muli %5, %c8_i32 : i32
    %c0_i32_2 = arith.constant 0 : i32
    %c16_i32_3 = arith.constant 16 : i32
    %7 = arith.addi %c0_i32_2, %c16_i32_3 : i32
    %c1_i32 = arith.constant 1 : i32
    scf.for %arg11 = %c0_i32_2 to %7 step %c1_i32  : i32 {
      %c8_i32_12 = arith.constant 8 : i32
      %18 = arith.muli %arg11, %c8_i32_12 : i32
      %19 = arith.addi %6, %18 : i32
      %20 = arith.index_cast %19 : i32 to index
      %21 = memref.load %arg2[%20] : memref<256xi32, #tpu.memory_space<smem>>
      %22 = arith.index_cast %21 : i32 to index
      %c0_13 = arith.constant 0 : index
      %23 = vector.load %arg9[%22, %c0_13] : memref<16x128xf32, #tpu.memory_space<vmem>>, vector<1x128xf32>
      %24 = arith.index_cast %19 : i32 to index
      %25 = memref.load %arg3[%24] : memref<256xi32, #tpu.memory_space<smem>>
      %26 = arith.index_cast %25 : i32 to index
      %c0_14 = arith.constant 0 : index
      %27 = vector.load %arg10[%26, %c0_14] : memref<16x128xf32, #tpu.memory_space<vmem>>, vector<1x128xf32>
      %28 = arith.addf %23, %27 : vector<1x128xf32>
      %c1_i32_15 = arith.constant 1 : i32
      %29 = arith.addi %19, %c1_i32_15 : i32
      %30 = arith.index_cast %29 : i32 to index
      %31 = memref.load %arg2[%30] : memref<256xi32, #tpu.memory_space<smem>>
      %32 = arith.index_cast %31 : i32 to index
      %c0_16 = arith.constant 0 : index
      %33 = vector.load %arg9[%32, %c0_16] : memref<16x128xf32, #tpu.memory_space<vmem>>, vector<1x128xf32>
      %c1_i32_17 = arith.constant 1 : i32
      %34 = arith.addi %19, %c1_i32_17 : i32
      %35 = arith.index_cast %34 : i32 to index
      %36 = memref.load %arg3[%35] : memref<256xi32, #tpu.memory_space<smem>>
      %37 = arith.index_cast %36 : i32 to index
      %c0_18 = arith.constant 0 : index
      %38 = vector.load %arg10[%37, %c0_18] : memref<16x128xf32, #tpu.memory_space<vmem>>, vector<1x128xf32>
      %39 = arith.addf %33, %38 : vector<1x128xf32>
      %40 = arith.maximumf %28, %39 : vector<1x128xf32>
      %c2_i32 = arith.constant 2 : i32
      %41 = arith.addi %19, %c2_i32 : i32
      %42 = arith.index_cast %41 : i32 to index
      %43 = memref.load %arg2[%42] : memref<256xi32, #tpu.memory_space<smem>>
      %44 = arith.index_cast %43 : i32 to index
      %c0_19 = arith.constant 0 : index
      %45 = vector.load %arg9[%44, %c0_19] : memref<16x128xf32, #tpu.memory_space<vmem>>, vector<1x128xf32>
      %c2_i32_20 = arith.constant 2 : i32
      %46 = arith.addi %19, %c2_i32_20 : i32
      %47 = arith.index_cast %46 : i32 to index
      %48 = memref.load %arg3[%47] : memref<256xi32, #tpu.memory_space<smem>>
      %49 = arith.index_cast %48 : i32 to index
      %c0_21 = arith.constant 0 : index
      %50 = vector.load %arg10[%49, %c0_21] : memref<16x128xf32, #tpu.memory_space<vmem>>, vector<1x128xf32>
      %51 = arith.addf %45, %50 : vector<1x128xf32>
      %52 = arith.maximumf %40, %51 : vector<1x128xf32>
      %c3_i32 = arith.constant 3 : i32
      %53 = arith.addi %19, %c3_i32 : i32
      %54 = arith.index_cast %53 : i32 to index
      %55 = memref.load %arg2[%54] : memref<256xi32, #tpu.memory_space<smem>>
      %56 = arith.index_cast %55 : i32 to index
      %c0_22 = arith.constant 0 : index
      %57 = vector.load %arg9[%56, %c0_22] : memref<16x128xf32, #tpu.memory_space<vmem>>, vector<1x128xf32>
      %c3_i32_23 = arith.constant 3 : i32
      %58 = arith.addi %19, %c3_i32_23 : i32
      %59 = arith.index_cast %58 : i32 to index
      %60 = memref.load %arg3[%59] : memref<256xi32, #tpu.memory_space<smem>>
      %61 = arith.index_cast %60 : i32 to index
      %c0_24 = arith.constant 0 : index
      %62 = vector.load %arg10[%61, %c0_24] : memref<16x128xf32, #tpu.memory_space<vmem>>, vector<1x128xf32>
      %63 = arith.addf %57, %62 : vector<1x128xf32>
      %64 = arith.maximumf %52, %63 : vector<1x128xf32>
      %c4_i32 = arith.constant 4 : i32
      %65 = arith.addi %19, %c4_i32 : i32
      %66 = arith.index_cast %65 : i32 to index
      %67 = memref.load %arg2[%66] : memref<256xi32, #tpu.memory_space<smem>>
      %68 = arith.index_cast %67 : i32 to index
      %c0_25 = arith.constant 0 : index
      %69 = vector.load %arg9[%68, %c0_25] : memref<16x128xf32, #tpu.memory_space<vmem>>, vector<1x128xf32>
      %c4_i32_26 = arith.constant 4 : i32
      %70 = arith.addi %19, %c4_i32_26 : i32
      %71 = arith.index_cast %70 : i32 to index
      %72 = memref.load %arg3[%71] : memref<256xi32, #tpu.memory_space<smem>>
      %73 = arith.index_cast %72 : i32 to index
      %c0_27 = arith.constant 0 : index
      %74 = vector.load %arg10[%73, %c0_27] : memref<16x128xf32, #tpu.memory_space<vmem>>, vector<1x128xf32>
      %75 = arith.addf %69, %74 : vector<1x128xf32>
      %76 = arith.maximumf %64, %75 : vector<1x128xf32>
      %c5_i32 = arith.constant 5 : i32
      %77 = arith.addi %19, %c5_i32 : i32
      %78 = arith.index_cast %77 : i32 to index
      %79 = memref.load %arg2[%78] : memref<256xi32, #tpu.memory_space<smem>>
      %80 = arith.index_cast %79 : i32 to index
      %c0_28 = arith.constant 0 : index
      %81 = vector.load %arg9[%80, %c0_28] : memref<16x128xf32, #tpu.memory_space<vmem>>, vector<1x128xf32>
      %c5_i32_29 = arith.constant 5 : i32
      %82 = arith.addi %19, %c5_i32_29 : i32
      %83 = arith.index_cast %82 : i32 to index
      %84 = memref.load %arg3[%83] : memref<256xi32, #tpu.memory_space<smem>>
      %85 = arith.index_cast %84 : i32 to index
      %c0_30 = arith.constant 0 : index
      %86 = vector.load %arg10[%85, %c0_30] : memref<16x128xf32, #tpu.memory_space<vmem>>, vector<1x128xf32>
      %87 = arith.addf %81, %86 : vector<1x128xf32>
      %88 = arith.maximumf %76, %87 : vector<1x128xf32>
      %c6_i32 = arith.constant 6 : i32
      %89 = arith.addi %19, %c6_i32 : i32
      %90 = arith.index_cast %89 : i32 to index
      %91 = memref.load %arg2[%90] : memref<256xi32, #tpu.memory_space<smem>>
      %92 = arith.index_cast %91 : i32 to index
      %c0_31 = arith.constant 0 : index
      %93 = vector.load %arg9[%92, %c0_31] : memref<16x128xf32, #tpu.memory_space<vmem>>, vector<1x128xf32>
      %c6_i32_32 = arith.constant 6 : i32
      %94 = arith.addi %19, %c6_i32_32 : i32
      %95 = arith.index_cast %94 : i32 to index
      %96 = memref.load %arg3[%95] : memref<256xi32, #tpu.memory_space<smem>>
      %97 = arith.index_cast %96 : i32 to index
      %c0_33 = arith.constant 0 : index
      %98 = vector.load %arg10[%97, %c0_33] : memref<16x128xf32, #tpu.memory_space<vmem>>, vector<1x128xf32>
      %99 = arith.addf %93, %98 : vector<1x128xf32>
      %100 = arith.maximumf %88, %99 : vector<1x128xf32>
      %c7_i32 = arith.constant 7 : i32
      %101 = arith.addi %19, %c7_i32 : i32
      %102 = arith.index_cast %101 : i32 to index
      %103 = memref.load %arg2[%102] : memref<256xi32, #tpu.memory_space<smem>>
      %104 = arith.index_cast %103 : i32 to index
      %c0_34 = arith.constant 0 : index
      %105 = vector.load %arg9[%104, %c0_34] : memref<16x128xf32, #tpu.memory_space<vmem>>, vector<1x128xf32>
      %c7_i32_35 = arith.constant 7 : i32
      %106 = arith.addi %19, %c7_i32_35 : i32
      %107 = arith.index_cast %106 : i32 to index
      %108 = memref.load %arg3[%107] : memref<256xi32, #tpu.memory_space<smem>>
      %109 = arith.index_cast %108 : i32 to index
      %c0_36 = arith.constant 0 : index
      %110 = vector.load %arg10[%109, %c0_36] : memref<16x128xf32, #tpu.memory_space<vmem>>, vector<1x128xf32>
      %111 = arith.addf %105, %110 : vector<1x128xf32>
      %112 = arith.maximumf %100, %111 : vector<1x128xf32>
      %c0_37 = arith.constant 0 : index
      %113 = arith.index_cast %arg11 : i32 to index
      %c0_38 = arith.constant 0 : index
      %114 = vector.load %arg8[%c0_37, %113, %c0_38] : memref<1x16x128xf32, #tpu.memory_space<vmem>>, vector<1x1x128xf32>
      %115 = vector.shape_cast %114 : vector<1x1x128xf32> to vector<1x128xf32>
      %116 = vector.shape_cast %112 : vector<1x128xf32> to vector<1x1x128xf32>
      tpu.vector_store %arg8[%c0_37, %113, %c0_38], %116 {strides = array<i32>} : memref<1x16x128xf32, #tpu.memory_space<vmem>>, vector<1x1x128xf32>,
    }
    %c16_i32_4 = arith.constant 16 : i32
    %c0 = arith.constant 0 : index
    %c0_5 = arith.constant 0 : index
    %c0_6 = arith.constant 0 : index
    %8 = vector.load %arg8[%c0, %c0_5, %c0_6] : memref<1x16x128xf32, #tpu.memory_space<vmem>>, vector<1x16x128xf32>
    %9 = vector.shape_cast %8 : vector<1x16x128xf32> to vector<16x128xf32>
    %c0_7 = arith.constant 0 : index
    %c0_8 = arith.constant 0 : index
    %10 = vector.load %arg7[%c0_7, %c0_8] : memref<1x128xf32, #tpu.memory_space<vmem>>, vector<1x128xf32>
    %11 = vector.broadcast %10 : vector<1x128xf32> to vector<16x128xf32>
    %12 = arith.addf %9, %11 : vector<16x128xf32>
    %cst = arith.constant 0.000000e+00 : f32
    %13 = vector.broadcast %cst : f32 to vector<16x128xf32>
    %14 = arith.maximumf %12, %13 : vector<16x128xf32>
    %c0_9 = arith.constant 0 : index
    %c0_10 = arith.constant 0 : index
    %c0_11 = arith.constant 0 : index
    %15 = vector.load %arg8[%c0_9, %c0_10, %c0_11] : memref<1x16x128xf32, #tpu.memory_space<vmem>>, vector<1x16x128xf32>
    %16 = vector.shape_cast %15 : vector<1x16x128xf32> to vector<16x128xf32>
    %17 = vector.shape_cast %14 : vector<16x128xf32> to vector<1x16x128xf32>
    tpu.vector_store %arg8[%c0_9, %c0_10, %c0_11], %17 {strides = array<i32>} : memref<1x16x128xf32, #tpu.memory_space<vmem>>, vector<1x16x128xf32>,
    return
  }
  func.func @transform_0(%arg0: i32, %arg1: i32, %arg2: memref<256xi32, #tpu.memory_space<smem>>, %arg3: memref<256xi32, #tpu.memory_space<smem>>) -> (i32, i32, i32) {
    %c0_i32 = arith.constant 0 : i32
    %c0_i32_0 = arith.constant 0 : i32
    %c0_i32_1 = arith.constant 0 : i32
    return %arg0, %c0_i32, %c0_i32_0 : i32, i32, i32
  }
  func.func @transform_1(%arg0: i32, %arg1: i32, %arg2: memref<256xi32, #tpu.memory_space<smem>>, %arg3: memref<256xi32, #tpu.memory_space<smem>>) -> (i32, i32) {
    %c0_i32 = arith.constant 0 : i32
    %c0_i32_0 = arith.constant 0 : i32
    %c0_i32_1 = arith.constant 0 : i32
    return %c0_i32, %c0_i32_0 : i32, i32
  }
  func.func @transform_2(%arg0: i32, %arg1: i32, %arg2: memref<256xi32, #tpu.memory_space<smem>>, %arg3: memref<256xi32, #tpu.memory_space<smem>>) -> (i32, i32) {
    %c0_i32 = arith.constant 0 : i32
    %c0_i32_0 = arith.constant 0 : i32
    %c0_i32_1 = arith.constant 0 : i32
    return %c0_i32, %c0_i32_0 : i32, i32
  }
  func.func @transform_3(%arg0: i32, %arg1: i32, %arg2: memref<256xi32, #tpu.memory_space<smem>>, %arg3: memref<256xi32, #tpu.memory_space<smem>>) -> (i32, i32) {
    %c0_i32 = arith.constant 0 : i32
    %c0_i32_0 = arith.constant 0 : i32
    %c0_i32_1 = arith.constant 0 : i32
    return %c0_i32, %c0_i32_0 : i32, i32
  }
  func.func @transform_4(%arg0: i32, %arg1: i32, %arg2: memref<256xi32, #tpu.memory_space<smem>>, %arg3: memref<256xi32, #tpu.memory_space<smem>>) -> (i32, i32, i32) {
    %c0_i32 = arith.constant 0 : i32
    %c0_i32_0 = arith.constant 0 : i32
    return %arg0, %arg1, %c0_i32 : i32, i32, i32
  }
}

</mosaic_0001>

<llo_original>
// kernel: tpu_custom_call.1
$region0: #{tpu_custom_call.1}
  #allocation0 [shape = 'u32[]', space=smem, size = 0x4, offset = 0x4, fixed_abs, tag = 'smem constant byte address 0x4 - core index']
  #allocation1 [shape = 'u32[72,128]{1,0:T(1,128)}', space=vmem, size = 0x9000, scoped, tag = 'internal scratch']
  #allocation2 [shape = 'f32[16,128]{1,0:T(8,128)}', space=vmem, size = 0x2000, scoped, tag = 'scratch operand']
  #allocation3 [shape = 'f32[16,128]{1,0:T(8,128)}', space=vmem, size = 0x2000, scoped, tag = 'scratch operand']
  #allocation4 [shape = 's32[1]{0}', space=sflag, size = 0x4, scoped, tag = 'scoped memory for tpu_custom_call.1']
  #allocation5 [shape = 'u8[1024]{0}', space=smem, size = 0x400, scoped, tag = 'prefetched SMEM operand 0']
  #allocation6 [shape = 'u8[1024]{0}', space=smem, size = 0x400, scoped, tag = 'prefetched SMEM operand 1']
  %s0 = inlined_call_operand.vmem [shape: s32[256], index: 0, kind: input, shape index: {}]
  %s1 = inlined_call_operand.vmem [shape: s32[256], index: 1, kind: input, shape index: {}]
  %s2 = inlined_call_operand.vmem [shape: f32[2,16,4], index: 2, kind: input, shape index: {}]
  %s3 = inlined_call_operand.vmem [shape: f32[4,128], index: 3, kind: input, shape index: {}]
  %s4 = inlined_call_operand.vmem [shape: f32[4,128], index: 4, kind: input, shape index: {}]
  %s5 = inlined_call_operand.vmem [shape: f32[1,128], index: 5, kind: input, shape index: {}]
  %s6 = inlined_call_operand.hbm [shape: f32[2,16,128], index: 6, kind: output, shape index: {}]
  %s7 = sld [smem:[#allocation0]]
  $region60: #{tpu_custom_call.1} parent=0
    _
  %s9 = ssub.s32 1, %s7
  %s10 = scalar_select 0, %s9, %s7
  %s12 = sshll.u32 %s0, 4
  %s13 = int_to_ptr.vmem [resolvable:$true] %s12
  %15 = dma.vmem_to_smem %s13, 32, [#allocation5], [#allocation4]
  %s17 = sshll.u32 %s1, 4
  %s18 = int_to_ptr.vmem [resolvable:$true] %s17
  %20 = dma.vmem_to_smem %s18, 32, [#allocation6], [#allocation4]
  %22 = dma.done [#allocation4], 64
  %23 = sfence
  $region1: #{tpu_custom_call.1} parent=0
    #allocation7 [shape = 'u8[16384]{0}', space=vmem, size = 0x4000, scoped, tag = 'output window, operand 0']
    #allocation8 [shape = 's32[2]{0}', space=sflag, size = 0x8, scoped, tag = 'scoped memory for tpu_custom_call.1']
    %24 = vsyncpa [#allocation8], 0
    %s25 = scalar_lea.sflag [#allocation8], 1
    %26 = vsyncpa %s25, 0
    loop: start=0, step=1, limit=4
    $region2: #{tpu_custom_call.1} parent=1 // loop_pre_header
      _
    $region3: #{tpu_custom_call.1} parent=1 // loop_header
      %s28 = sphi 0, %s32
      %p29 = scmp.ge.s32.totalorder %s28, 4
      %s35 = sphi 0, %s47
      %s36 = sphi 0, %s43
      %s37 = sphi 0, %s35
      %s38 = sphi 0, %s36
      %s39 = sphi 0, %s37
      %s40 = sphi 0, %s38
      %s50 = sphi 0, %s52
      %s53 = sphi 0, %s50
      %s54 = sphi 0, %s53
      %s70 = sphi 0, %s54
      %s74 = sphi 0, %s74
      %s76 = sphi 0, %s74
      %s77 = sphi 0, %s76
      %s91 = sphi 0, %s77
      %s95 = sphi 0, %s95
      %s97 = sphi 0, %s95
      %s98 = sphi 0, %s97
      %s112 = sphi 0, %s98
      %s116 = sphi 0, %s116
      %s118 = sphi 0, %s116
      %s119 = sphi 0, %s118
      %s133 = sphi 0, %s119
      %s141 = sphi 0, %s143
      %s144 = sphi 0, %s141
      %s145 = sphi 0, %s144
      %s161 = sphi 0, %s145
    $region4: #{tpu_custom_call.1} parent=1 // loop_header_branch
      %31 = sbr.rel (%p29) target = $region8
    $region5: #{tpu_custom_call.1} parent=1 // loop_body
      %s33 = ssub.s32 %s28, 1
      %s34 = ssub.s32 %s28, 2
      %s41 = sadd.s32 1, %s36
      %p42 = scmp.ge.s32.totalorder %s41, 1
      %s43 = scalar_select %p42, 0, %s41
      %s44 = sadd.s32 1, %s35
      %s45 = scalar_select %p42, %s44, %s35
      %p46 = scmp.ge.s32.totalorder %s45, 2
      %s47 = scalar_select %p46, 0, %s45
      %s48 = ssub.s32 %s35, %s47
      %p49 = scmp.eq.s32.totalorder %s48, 0
      %s51 = sadd.s32 %s50, 1
      %s52 = scalar_select %p49, %s50, %s51
      %p55 = pneg %p49
      %p56 = scmp.eq.s32.totalorder %s28, 1
      %p57 = por %p55, %p56
      %p58 = scmp.ne.s32.totalorder %s50, %s53
      %p59 = scmp.eq.s32.totalorder %s28, 0
      %p60 = por %p58, %p59
      %p61 = scmp.ne.s32.totalorder %s50, %s53
      %p62 = scmp.eq.s32.totalorder %s33, 1
      %p63 = por %p61, %p62
      %p64 = scmp.ne.s32.totalorder %s53, %s54
      %p65 = scmp.eq.s32.totalorder %s33, 0
      %p66 = por %p64, %p65
      %p67 = scmp.ne.s32.totalorder %s53, %s54
      %p68 = scmp.eq.s32.totalorder %s34, 1
      %p69 = por %p67, %p68
      %p71 = scmp.ne.s32.totalorder %s54, %s70
      %p72 = scmp.eq.s32.totalorder %s34, 0
      %p73 = por %p71, %p72
      %s75 = sadd.s32 %s74, 1
      %p78 = scmp.eq.s32.totalorder %s28, 1
      %p79 = scmp.ne.s32.totalorder %s74, %s76
      %p80 = scmp.eq.s32.totalorder %s28, 0
      %p81 = por %p79, %p80
      %p82 = scmp.ne.s32.totalorder %s74, %s76
      %p83 = scmp.eq.s32.totalorder %s33, 1
      %p84 = por %p82, %p83
      %p85 = scmp.ne.s32.totalorder %s76, %s77
      %p86 = scmp.eq.s32.totalorder %s33, 0
      %p87 = por %p85, %p86
      %p88 = scmp.ne.s32.totalorder %s76, %s77
      %p89 = scmp.eq.s32.totalorder %s34, 1
      %p90 = por %p88, %p89
      %p92 = scmp.ne.s32.totalorder %s77, %s91
      %p93 = scmp.eq.s32.totalorder %s34, 0
      %p94 = por %p92, %p93
      %s96 = sadd.s32 %s95, 1
      %p99 = scmp.eq.s32.totalorder %s28, 1
      %p100 = scmp.ne.s32.totalorder %s95, %s97
      %p101 = scmp.eq.s32.totalorder %s28, 0
      %p102 = por %p100, %p101
      %p103 = scmp.ne.s32.totalorder %s95, %s97
      %p104 = scmp.eq.s32.totalorder %s33, 1
      %p105 = por %p103, %p104
      %p106 = scmp.ne.s32.totalorder %s97, %s98
      %p107 = scmp.eq.s32.totalorder %s33, 0
      %p108 = por %p106, %p107
      %p109 = scmp.ne.s32.totalorder %s97, %s98
      %p110 = scmp.eq.s32.totalorder %s34, 1
      %p111 = por %p109, %p110
      %p113 = scmp.ne.s32.totalorder %s98, %s112
      %p114 = scmp.eq.s32.totalorder %s34, 0
      %p115 = por %p113, %p114
      %s117 = sadd.s32 %s116, 1
      %p120 = scmp.eq.s32.totalorder %s28, 1
      %p121 = scmp.ne.s32.totalorder %s116, %s118
      %p122 = scmp.eq.s32.totalorder %s28, 0
      %p123 = por %p121, %p122
      %p124 = scmp.ne.s32.totalorder %s116, %s118
      %p125 = scmp.eq.s32.totalorder %s33, 1
      %p126 = por %p124, %p125
      %p127 = scmp.ne.s32.totalorder %s118, %s119
      %p128 = scmp.eq.s32.totalorder %s33, 0
      %p129 = por %p127, %p128
      %p130 = scmp.ne.s32.totalorder %s118, %s119
      %p131 = scmp.eq.s32.totalorder %s34, 1
      %p132 = por %p130, %p131
      %p134 = scmp.ne.s32.totalorder %s119, %s133
      %p135 = scmp.eq.s32.totalorder %s34, 0
      %p136 = por %p134, %p135
      %s137 = ssub.s32 %s35, %s47
      %s138 = ssub.s32 %s36, %s43
      %s139 = sor.u32 %s137, %s138
      %p140 = scmp.eq.s32.totalorder %s139, 0
      %s142 = sadd.s32 %s141, 1
      %s143 = scalar_select %p140, %s141, %s142
      %p146 = pneg %p140
      %p147 = scmp.eq.s32.totalorder %s28, 1
      %p148 = por %p146, %p147
      %p149 = scmp.ne.s32.totalorder %s141, %s144
      %p150 = scmp.eq.s32.totalorder %s28, 0
      %p151 = por %p149, %p150
      %p152 = scmp.ne.s32.totalorder %s141, %s144
      %p153 = scmp.eq.s32.totalorder %s33, 1
      %p154 = por %p152, %p153
      %p155 = scmp.ne.s32.totalorder %s144, %s145
      %p156 = scmp.eq.s32.totalorder %s33, 0
      %p157 = por %p155, %p156
      %p158 = scmp.ne.s32.totalorder %s144, %s145
      %p159 = scmp.eq.s32.totalorder %s34, 1
      %p160 = por %p158, %p159
      %p162 = scmp.ne.s32.totalorder %s145, %s161
      %p163 = scmp.eq.s32.totalorder %s34, 0
      %p164 = por %p162, %p163
      %p165 = scmp.le.s32.totalorder 1, %s28
      %p166 = scmp.lt.s32.totalorder %s28, 3
      %p167 = pnand %p165, %p166
      %p168 = pneg %p167
      // Predicated region
      $region9: #{tpu_custom_call.1} parent=5 // pred_check
        _
      $region10: #{tpu_custom_call.1} parent=5 // pred_check_branch
        %170 = sbr.rel (%p167) target = $region12
      $region11: #{tpu_custom_call.1} parent=5 // pred_region
        %s171 = ssub.s32 %s28, 1
        // Predicated region
        $region13: #{tpu_custom_call.1} parent=11 // pred_check
          %p172 = pneg %p87
        $region14: #{tpu_custom_call.1} parent=11 // pred_check_branch
          %174 = sbr.rel (%p172) target = $region16
        $region15: #{tpu_custom_call.1} parent=11 // pred_region
          _
        $region16: #{tpu_custom_call.1} parent=11 // pred_fallthru
          _
        // Predicated region
        $region17: #{tpu_custom_call.1} parent=11 // pred_check
          %p175 = pneg %p108
        $region18: #{tpu_custom_call.1} parent=11 // pred_check_branch
          %177 = sbr.rel (%p175) target = $region20
        $region19: #{tpu_custom_call.1} parent=11 // pred_region
          _
        $region20: #{tpu_custom_call.1} parent=11 // pred_fallthru
          _
        // Predicated region
        $region21: #{tpu_custom_call.1} parent=11 // pred_check
          %p178 = pneg %p129
        $region22: #{tpu_custom_call.1} parent=11 // pred_check_branch
          %180 = sbr.rel (%p178) target = $region24
        $region23: #{tpu_custom_call.1} parent=11 // pred_region
          _
        $region24: #{tpu_custom_call.1} parent=11 // pred_fallthru
          _
      $region12: #{tpu_custom_call.1} parent=5 // pred_fallthru
        _
      %p181 = scmp.lt.s32.totalorder %s28, 2
      // Predicated region
      $region25: #{tpu_custom_call.1} parent=5 // pred_check
        %p182 = pneg %p181
      $region26: #{tpu_custom_call.1} parent=5 // pred_check_branch
        %184 = sbr.rel (%p182) target = $region28
      $region27: #{tpu_custom_call.1} parent=5 // pred_region
        // Predicated region
        $region29: #{tpu_custom_call.1} parent=27 // pred_check
          %p185 = pneg %p60
        $region30: #{tpu_custom_call.1} parent=27 // pred_check_branch
          %187 = sbr.rel (%p185) target = $region32
        $region31: #{tpu_custom_call.1} parent=27 // pred_region
          %p188 = scmp.lt.s32.totalorder %s35, 1
          %s189 = scalar_select %p188, %s35, 1
          %s190 = smul.addr %s189, 2
          %s191 = smul.addr %s190, 8
          %s192 = scalar_lea.vmem %s2, %s191
        $region32: #{tpu_custom_call.1} parent=27 // pred_fallthru
          _
      $region28: #{tpu_custom_call.1} parent=5 // pred_fallthru
        _
      %p193 = scmp.le.s32.totalorder 1, %s28
      %p194 = scmp.lt.s32.totalorder %s28, 3
      %p195 = pnand %p193, %p194
      %p196 = pneg %p195
      // Predicated region
      $region33: #{tpu_custom_call.1} parent=5 // pred_check
        _
      $region34: #{tpu_custom_call.1} parent=5 // pred_check_branch
        %198 = sbr.rel (%p195) target = $region36
      $region35: #{tpu_custom_call.1} parent=5 // pred_region
        %s199 = ssub.s32 %s28, 1
        %p200 = scmp.lt.s32.totalorder %s37, 1
        %s201 = scalar_select %p200, %s37, 1
        %s202 = smul.addr %s201, 2
        %s203 = smul.addr %s202, 8
        %s204 = scalar_lea.vmem %s2, %s203
        %p205 = pneg %p66
        %p206 = pneg %p63
        %p207 = pneg %p87
        %p208 = pneg %p84
        %p209 = pneg %p108
        %p210 = pneg %p105
        %p211 = pneg %p129
        %p212 = pneg %p126
        %p213 = pneg %p157
        %p214 = pneg %p154
        %s215 = sand.u32 %s144, 1
        %s216 = scalar_lea.sflag [#allocation8], %s215
        %s217 = sand.u32 %s144, 1
        %s218 = smul.addr %s217, 16
        %s219 = scalar_lea.vmem [#allocation7], %s218
        %p220 = scmp.lt.s32.totalorder %s37, 1
        %s221 = scalar_select %p220, %s37, 1
        %s222 = smul.addr %s221, 2
        %s223 = smul.addr %s222, 8
        %s224 = scalar_lea.vmem %s2, %s223
        %s225 = smul.u32 2, %s38
        %p226 = scmp.eq.s32.totalorder %s38, 0
        // Predicated region
        $region37: #{tpu_custom_call.1} parent=35 // pred_check
          %p227 = pneg %p226
        $region38: #{tpu_custom_call.1} parent=35 // pred_check_branch
          %229 = sbr.rel (%p227) target = $region40
        $region39: #{tpu_custom_call.1} parent=35 // pred_region
          %v230 = vld [vmem:[%s224] sm:$0xff]
          %v231 = vld [vmem:[%s224 + $0x8] sm:$0xff]
          %v232 = vld [vmem:[%s3] sm:$0xf]
          %vm233 = vcmask 31744
          %v235 = vsel %vm233, %v230, 0
          %v238 = vsel %vm233, %v231, 0
          %vm240 = vcmask 1043456
          %v242 = vsel %vm240, %v232, 0
          %244 = vmatpush.msra.mxu0 0.0
          %245 = vmatpush.msra.mxu0 0.0
          %246 = vmatpush.msra.mxu0 0.0
          %247 = vmatpush.msra.mxu0 0.0
          %248 = vmatpush.msra.mxu0 0.0
          %249 = vmatpush.msra.mxu0 0.0
          %250 = vmatpush.msra.mxu0 0.0
          %251 = vmatpush.msra.mxu0 0.0
          %252 = vmatpush.msra.mxu0 0.0
          %253 = vmatpush.msra.mxu0 0.0
          %254 = vmatpush.msra.mxu0 0.0
          %255 = vmatpush.msra.mxu0 0.0
          %256 = vmatpush.msra.mxu0 0.0
          %257 = vmatpush.msra.mxu0 0.0
          %258 = vmatpush.msra.mxu0 0.0
          %259 = vmatpush.msra.mxu0 %v242
          %260 = vmatmul.f32.gmra.mxu0 %v235
          %v261 = vpop.f32.mrf.mxu0
          %v262 = vadd.f32 0.0, %v261
          %263 = vmatmul.f32.gmra.mxu0 %v238
          %v264 = vpop.f32.mrf.mxu0
          %v265 = vadd.f32 0.0, %v264
          %266 = vdwg.mxu0
          %267 = vst [vmem:[#allocation2] sm:$0xff] %v262
          %268 = vst [vmem:[#allocation2 + $0x8] sm:$0xff] %v265
          %v269 = vld [vmem:[%s4] sm:$0xf]
          %v271 = vsel %vm240, %v269, 0
          %273 = vmatpush.msra.mxu0 0.0
          %274 = vmatpush.msra.mxu0 0.0
          %275 = vmatpush.msra.mxu0 0.0
          %276 = vmatpush.msra.mxu0 0.0
          %277 = vmatpush.msra.mxu0 0.0
          %278 = vmatpush.msra.mxu0 0.0
          %279 = vmatpush.msra.mxu0 0.0
          %280 = vmatpush.msra.mxu0 0.0
          %281 = vmatpush.msra.mxu0 0.0
          %282 = vmatpush.msra.mxu0 0.0
          %283 = vmatpush.msra.mxu0 0.0
          %284 = vmatpush.msra.mxu0 0.0
          %285 = vmatpush.msra.mxu0 0.0
          %286 = vmatpush.msra.mxu0 0.0
          %287 = vmatpush.msra.mxu0 0.0
          %288 = vmatpush.msra.mxu0 %v271
          %289 = vmatmul.f32.gmra.mxu0 %v235
          %v290 = vpop.f32.mrf.mxu0
          %v291 = vadd.f32 0.0, %v290
          %292 = vmatmul.f32.gmra.mxu0 %v238
          %v293 = vpop.f32.mrf.mxu0
          %v294 = vadd.f32 0.0, %v293
          %295 = vdwg.mxu0
          %296 = vst [vmem:[#allocation3] sm:$0xff] %v291
          %297 = vst [vmem:[#allocation3 + $0x8] sm:$0xff] %v294
        $region40: #{tpu_custom_call.1} parent=35 // pred_fallthru
          _
        %s298 = smul.u32 %s37, 16
        %s299 = smul.u32 %s38, 16
        %s300 = sadd.s32 %s298, %s299
        %s301 = smul.u32 %s300, 8
        loop: start=0, step=1, limit=16
        $region41: #{tpu_custom_call.1} parent=35 // loop_pre_header
          _
        $region42: #{tpu_custom_call.1} parent=35 // loop_header
          %s303 = sphi 0, %s307
          %p304 = scmp.ge.s32.totalorder %s303, 16
        $region43: #{tpu_custom_call.1} parent=35 // loop_header_branch
          %306 = sbr.rel (%p304) target = $region47
        $region44: #{tpu_custom_call.1} parent=35 // loop_body
          %s308 = smul.u32 %s303, 8
          %s309 = sadd.s32 %s301, %s308
          %s310 = sld [smem:[#allocation5 + %s309]]
          %s311 = scalar_lea.vmem [#allocation2], %s310
          %v312 = vld [vmem:[%s311] sm:$0x1]
          %s313 = sld [smem:[#allocation6 + %s309]]
          %s314 = scalar_lea.vmem [#allocation3], %s313
          %v315 = vld [vmem:[%s314] sm:$0x1]
          %v316 = vadd.f32 %v312, %v315
          %s317 = sadd.s32 %s309, 1
          %s318 = sld [smem:[#allocation5 + %s317]]
          %s319 = scalar_lea.vmem [#allocation2], %s318
          %v320 = vld [vmem:[%s319] sm:$0x1]
          %s321 = sld [smem:[#allocation6 + %s317]]
          %s322 = scalar_lea.vmem [#allocation3], %s321
          %v323 = vld [vmem:[%s322] sm:$0x1]
          %v324 = vadd.f32 %v320, %v323
          %v325 = vmax.f32 %v316, %v324
          %s326 = sadd.s32 %s309, 2
          %s327 = sld [smem:[#allocation5 + %s326]]
          %s328 = scalar_lea.vmem [#allocation2], %s327
          %v329 = vld [vmem:[%s328] sm:$0x1]
          %s330 = sld [smem:[#allocation6 + %s326]]
          %s331 = scalar_lea.vmem [#allocation3], %s330
          %v332 = vld [vmem:[%s331] sm:$0x1]
          %v333 = vadd.f32 %v329, %v332
          %v334 = vmax.f32 %v325, %v333
          %s335 = sadd.s32 %s309, 3
          %s336 = sld [smem:[#allocation5 + %s335]]
          %s337 = scalar_lea.vmem [#allocation2], %s336
          %v338 = vld [vmem:[%s337] sm:$0x1]
          %s339 = sld [smem:[#allocation6 + %s335]]
          %s340 = scalar_lea.vmem [#allocation3], %s339
          %v341 = vld [vmem:[%s340] sm:$0x1]
          %v342 = vadd.f32 %v338, %v341
          %v343 = vmax.f32 %v334, %v342
          %s344 = sadd.s32 %s309, 4
          %s345 = sld [smem:[#allocation5 + %s344]]
          %s346 = scalar_lea.vmem [#allocation2], %s345
          %v347 = vld [vmem:[%s346] sm:$0x1]
          %s348 = sld [smem:[#allocation6 + %s344]]
          %s349 = scalar_lea.vmem [#allocation3], %s348
          %v350 = vld [vmem:[%s349] sm:$0x1]
          %v351 = vadd.f32 %v347, %v350
          %v352 = vmax.f32 %v343, %v351
          %s353 = sadd.s32 %s309, 5
          %s354 = sld [smem:[#allocation5 + %s353]]
          %s355 = scalar_lea.vmem [#allocation2], %s354
          %v356 = vld [vmem:[%s355] sm:$0x1]
          %s357 = sld [smem:[#allocation6 + %s353]]
          %s358 = scalar_lea.vmem [#allocation3], %s357
          %v359 = vld [vmem:[%s358] sm:$0x1]
          %v360 = vadd.f32 %v356, %v359
          %v361 = vmax.f32 %v352, %v360
          %s362 = sadd.s32 %s309, 6
          %s363 = sld [smem:[#allocation5 + %s362]]
          %s364 = scalar_lea.vmem [#allocation2], %s363
          %v365 = vld [vmem:[%s364] sm:$0x1]
          %s366 = sld [smem:[#allocation6 + %s362]]
          %s367 = scalar_lea.vmem [#allocation3], %s366
          %v368 = vld [vmem:[%s367] sm:$0x1]
          %v369 = vadd.f32 %v365, %v368
          %v370 = vmax.f32 %v361, %v369
          %s371 = sadd.s32 %s309, 7
          %s372 = sld [smem:[#allocation5 + %s371]]
          %s373 = scalar_lea.vmem [#allocation2], %s372
          %v374 = vld [vmem:[%s373] sm:$0x1]
          %s375 = sld [smem:[#allocation6 + %s371]]
          %s376 = scalar_lea.vmem [#allocation3], %s375
          %v377 = vld [vmem:[%s376] sm:$0x1]
          %v378 = vadd.f32 %v374, %v377
          %v379 = vmax.f32 %v370, %v378
          %s380 = scalar_lea.vmem %s219, %s303 [#allocation7]
          %381 = vst [vmem:[%s380] sm:$0x1] %v379
        $region45: #{tpu_custom_call.1} parent=35 // loop_footer
          %s307 = sadd.s32 1, %s303
        $region46: #{tpu_custom_call.1} parent=35 // loop_footer_branch
          %302 = sbr.rel target = $region42
        $region47: #{tpu_custom_call.1} parent=35 // loop_exit
          _
        %v382 = vld [vmem:[%s219] sm:$0xff]
        %v383 = vld [vmem:[%s219 + $0x8] sm:$0xff]
        %v384 = vld [vmem:[%s5] sm:$0x1]
        %v386 = vperm.slane %v384, 0
        %v388 = vadd.f32 %v382, %v386
        %v389 = vadd.f32 %v383, %v386
        %v390 = vmax.f32 %v388, 0.0
        %v391 = vmax.f32 %v389, 0.0
        %392 = vst [vmem:[%s219] sm:$0xff] %v390
        %393 = vst [vmem:[%s219 + $0x8] sm:$0xff] %v391
        %s394 = sand.u32 %s144, 1
        %s395 = scalar_lea.sflag [#allocation8], %s394
        %s396 = sand.u32 %s144, 1
        %s397 = smul.addr %s396, 16
        %s398 = scalar_lea.vmem [#allocation7], %s397
        // Predicated region
        $region48: #{tpu_custom_call.1} parent=35 // pred_check
          %p399 = pneg %p154
        $region49: #{tpu_custom_call.1} parent=35 // pred_check_branch
          %401 = sbr.rel (%p399) target = $region51
        $region50: #{tpu_custom_call.1} parent=35 // pred_region
          %s402 = smul.u32 2, %s38
          %404 = vsyncadd %s395, 0
          %s405 = smul.addr %s37, 2
          %s406 = sadd.s32 %s402, %s405
          %s407 = smul.addr %s406, 8
          %s408 = scalar_lea.hbm %s6, %s407
          %s409 = sshll.u32 %s398, 4
          %s410 = int_to_ptr.vmem [resolvable:$true] %s409
          %s411 = sshll.u32 %s408, 4
          %s412 = int_to_ptr.hbm [resolvable:$true] %s411
          %417 = dma.vmem_to_hbm [thread:$0]  %s410, 256, %s412, %s395, 128, 128, 8
        $region51: #{tpu_custom_call.1} parent=35 // pred_fallthru
          _
      $region36: #{tpu_custom_call.1} parent=5 // pred_fallthru
        _
      %p418 = scmp.le.s32.totalorder 2, %s28
      // Predicated region
      $region52: #{tpu_custom_call.1} parent=5 // pred_check
        %p419 = pneg %p418
      $region53: #{tpu_custom_call.1} parent=5 // pred_check_branch
        %421 = sbr.rel (%p419) target = $region55
      $region54: #{tpu_custom_call.1} parent=5 // pred_region
        %s422 = ssub.s32 %s28, 2
        // Predicated region
        $region56: #{tpu_custom_call.1} parent=54 // pred_check
          %p423 = pneg %p160
        $region57: #{tpu_custom_call.1} parent=54 // pred_check_branch
          %425 = sbr.rel (%p423) target = $region59
        $region58: #{tpu_custom_call.1} parent=54 // pred_region
          %s426 = sand.u32 %s145, 1
          %s427 = scalar_lea.sflag [#allocation8], %s426
          %s428 = sand.u32 %s145, 1
          %s429 = smul.addr %s428, 16
          %s430 = scalar_lea.vmem [#allocation7], %s429
          %432 = dma.done %s427, 256
        $region59: #{tpu_custom_call.1} parent=54 // pred_fallthru
          _
      $region55: #{tpu_custom_call.1} parent=5 // pred_fallthru
        _
    $region6: #{tpu_custom_call.1} parent=1 // loop_footer
      %s32 = sadd.s32 1, %s28
    $region7: #{tpu_custom_call.1} parent=1 // loop_footer_branch
      %27 = sbr.rel target = $region3
    $region8: #{tpu_custom_call.1} parent=1 // loop_exit
      _
    %433 = vsyncpa [#allocation8], 1
    %s434 = scalar_lea.sflag [#allocation8], 1
    %435 = vsyncpa %s434, 1

</llo_original>
